<compile_context>
chip_gen: v5e
topology: v5e:2x2
jax: 0.10.0
libtpu: 0.0.40
codegen_flags: <defaults>
</compile_context>

<pallas_src>
import jax
import jax.numpy as jnp
import numpy as np
from jax.experimental import pallas as pl
from jax.experimental.pallas import tpu as pltpu

# Small, module-consistent shapes.
B, S, H, NH = 2, 8, 32, 4          # batch, seq, hidden(embed_size), num heads
HD = H // NH                       # head dim
BS = B * S                         # batch-fused row count
C = 10                             # numClasses
LANES = 128                        # lane-dense slab width
VOCABS = (50, 60, 70)              # vocab_size list for the three encoders
NEG_INF = -1e30

# Constant-slab row map (all sections 8-row aligned).
ROW_W1 = 0          # (128,128) fused q/k/v projection (block-diag + bias row)
ROW_MBD = 128       # (64,64)   block-diag mask for [K^T | V] head slabs
ROW_OBD = 192       # (64,64)   block-diag ones (per-head row sums)
ROW_WO = 256        # (32,32)   out_proj weight^T
ROW_MISC = 288      # row 288: bo (lanes 0:H); row 289: bcf (128 lanes)
ROW_PM = 296        # (6,16)    pooling/selection matrix (mean, first/S, last/S)
ROW_WCF = 304       # (96,128)  conv-taps -> classes, folded through final Linear
CONST_ROWS = 400
ACT_ROWS = 2 * BS   # 16 rows [xq|xk|xv|1] + 16 rows packed attention bias


def bert_head_kernel(act_ref, const_ref, out_ref):
    # act_ref  : (32,128)  rows 0:16 = [o3|o2|o1|1|0..], rows 16:32 = additive
    #                      attention bias tiled over the 4 heads (lanes 0:64)
    # const_ref: (400,128) packed weights / masks / pooling matrix (see row map)
    # out_ref  : (4,128)   rows 0:2 = fin (lanes 0:C), rows 2:4 = m (lanes 0:H)
    x = act_ref[0:BS, :]                                    # (16,128)
    sbias = act_ref[BS:2 * BS, :][:, 0:NH * BS]             # (16,64)

    w1 = const_ref[ROW_W1:ROW_W1 + 128, :]                  # (128,128)
    mbd = const_ref[ROW_MBD:ROW_MBD + NH * BS, :][:, 0:2 * H]      # (64,64)
    obd = const_ref[ROW_OBD:ROW_OBD + NH * BS, :][:, 0:NH * BS]    # (64,64)
    w_o = const_ref[ROW_WO:ROW_WO + H, :][:, 0:H]           # (32,32)
    misc = const_ref[ROW_MISC:ROW_MISC + 8, :]              # (8,128)
    p_m = const_ref[ROW_PM:ROW_PM + 8, :][:, 0:BS]          # (8,16) rows 6:8 zero
    w_cf = const_ref[ROW_WCF:ROW_WCF + 3 * H, :]            # (96,128)

    b_o = misc[0:1, 0:H]                                    # (1,32)
    b_cf = misc[1:2, :]                                     # (1,128)

    # Fused q/k/v projection, biases + 1/sqrt(HD) folded in (ones lane trick).
    qkv = jnp.dot(x, w1, preferred_element_type=jnp.float32)       # (16,128)
    q = qkv[:, 0:H]                                                 # scaled q
    kv = qkv[:, H:3 * H]                                            # [k | v]

    # Block-diagonal [K^T | V] slabs: replicate kv over the 4 head blocks and
    # mask, so both the packed scores and the packed P@V need one push each.
    kv_bd = jnp.concatenate([kv, kv, kv, kv], axis=0) * mbd         # (64,64)
    kT_bd = kv_bd[:, 0:H]                                           # (64,32)
    v_bd = kv_bd[:, H:2 * H]                                        # (64,32)

    # Packed scores for all 4 heads: lanes [16h:16h+16] = head h.
    s = jnp.einsum('qd,rd->qr', q, kT_bd,
                   preferred_element_type=jnp.float32)              # (16,64)
    s = s + sbias
    # Single packed row max (same constant per row => per-head softmax exact).
    s = s - jnp.max(s, axis=-1, keepdims=True)
    p = jnp.exp(s)
    z = jnp.dot(p, obd, preferred_element_type=jnp.float32)         # head sums
    p = p * pl.reciprocal(z, approx=True)

    attn = jnp.dot(p, v_bd, preferred_element_type=jnp.float32)     # (16,32)
    attn = jnp.dot(attn, w_o, preferred_element_type=jnp.float32) + b_o
    # TODO(synk): Dropout(p=0.2) and AvgPool1d(kernel_size=1) are inference
    # identities.
    y = attn + x[:, 2 * H:3 * H]                                    # + outputs1

    # One pooling matmul: rows 0:2 = per-batch mean(y), 2:4 = y_first/S,
    # 4:6 = y_last/S.  Conv1d + final Linear are folded through the mean.
    pooled = jnp.dot(p_m, y, preferred_element_type=jnp.float32)    # (8,32)
    m = pooled[0:B]                                                 # (2,32)
    tap0 = m - pooled[2 * B:3 * B]      # mean of y[t-1] (zero conv padding)
    tap2 = m - pooled[B:2 * B]          # mean of y[t+1]
    taps = jnp.concatenate([tap0, m, tap2], axis=-1)                # (2,96)

    fin = jnp.dot(taps, w_cf, preferred_element_type=jnp.float32) + b_cf  # (2,128)

    m_pad = jnp.concatenate([m, jnp.zeros((B, LANES - H), jnp.float32)], axis=-1)
    out_ref[...] = jnp.concatenate([fin, m_pad], axis=0)            # (4,128)


def pack_params(params):
    """Param-only packing: called once, hoisted out of the per-call path."""
    (wq, bq, wk, bk, wv, bv, wo, bo, cw, cb, wf, bf) = params
    scale = 1.0 / float(HD) ** 0.5
    f32 = jnp.float32

    # Fused projection weight: block-diag [WqT*scale, WkT, WvT], bias row at 96.
    w1 = jnp.zeros((128, 128), f32)
    w1 = w1.at[0:H, 0:H].set(wq.T * scale)
    w1 = w1.at[H:2 * H, H:2 * H].set(wk.T)
    w1 = w1.at[2 * H:3 * H, 2 * H:3 * H].set(wv.T)
    w1 = w1.at[3 * H, 0:H].set((bq * scale).reshape(H))
    w1 = w1.at[3 * H, H:2 * H].set(bk.reshape(H))
    w1 = w1.at[3 * H, 2 * H:3 * H].set(bv.reshape(H))

    # Block-diag mask for the replicated [K^T | V] slab.
    r_head = jnp.arange(NH * BS)[:, None] // BS
    c_head = (jnp.arange(2 * H)[None, :] % H) // HD
    mbd = (r_head == c_head).astype(f32)                            # (64,64)

    # Block-diag ones for per-head row sums.
    rr = jnp.arange(NH * BS)[:, None] // BS
    cc = jnp.arange(NH * BS)[None, :] // BS
    obd = (rr == cc).astype(f32)                                    # (64,64)

    # Conv taps folded through the final Linear (output padded to 128 lanes).
    wft = jnp.zeros((H, LANES), f32).at[:, :C].set(wf.T)            # (32,128)
    wcf = jnp.concatenate([cw[0].T, cw[1].T, cw[2].T], axis=0) @ wft  # (96,128)
    bf_pad = jnp.zeros((1, LANES), f32).at[:, :C].set(bf)
    bcf = (cb @ wft + bf_pad).reshape(LANES)

    # Pooling / selection matrix: mean, first/S, last/S per batch block.
    pm = jnp.zeros((3 * B, BS), f32)
    for b in range(B):
        pm = pm.at[b, b * S:(b + 1) * S].set(1.0 / S)
        pm = pm.at[B + b, b * S].set(1.0 / S)
        pm = pm.at[2 * B + b, b * S + S - 1].set(1.0 / S)

    cs = jnp.zeros((CONST_ROWS, LANES), f32)
    cs = cs.at[ROW_W1:ROW_W1 + 128, :].set(w1)
    cs = cs.at[ROW_MBD:ROW_MBD + NH * BS, 0:2 * H].set(mbd)
    cs = cs.at[ROW_OBD:ROW_OBD + NH * BS, 0:NH * BS].set(obd)
    cs = cs.at[ROW_WO:ROW_WO + H, 0:H].set(wo.T)
    cs = cs.at[ROW_MISC, 0:H].set(bo.reshape(H))
    cs = cs.at[ROW_MISC + 1, :].set(bcf)
    cs = cs.at[ROW_PM:ROW_PM + 3 * B, 0:BS].set(pm)
    cs = cs.at[ROW_WCF:ROW_WCF + 3 * H, :].set(wcf)
    return cs


@jax.jit
def bert_forward(o1, o2, o3, mask2, const_slab):
    # Per-call work: lane-dense activation slab only (layout plumbing).
    xq = o3.reshape(BS, H)
    xk = o2.reshape(BS, H)
    xv = o1.reshape(BS, H)
    x_block = jnp.concatenate(
        [xq, xk, xv,
         jnp.ones((BS, 1), jnp.float32),
         jnp.zeros((BS, LANES - 3 * H - 1), jnp.float32)], axis=-1)   # (16,128)

    # Additive attention bias: key padding + cross-batch block mask, tiled x4.
    qb = jnp.arange(BS)[:, None] // S
    kb = jnp.arange(BS)[None, :] // S
    kvalid = (mask2.reshape(BS) > 0)[None, :]
    attn_bias = jnp.where((qb == kb) & kvalid, 0.0, NEG_INF).astype(jnp.float32)
    bias_block = jnp.concatenate(
        [jnp.tile(attn_bias, (1, NH)),
         jnp.zeros((BS, LANES - NH * BS), jnp.float32)], axis=-1)     # (16,128)

    act = jnp.concatenate([x_block, bias_block], axis=0)              # (32,128)

    out = pl.pallas_call(
        bert_head_kernel,
        out_shape=jax.ShapeDtypeStruct((2 * B, LANES), jnp.float32),
        grid=(1,),
        in_specs=[
            pl.BlockSpec((ACT_ROWS, LANES), lambda i: (0, 0)),
            pl.BlockSpec((CONST_ROWS, LANES), lambda i: (0, 0)),
        ],
        out_specs=pl.BlockSpec((2 * B, LANES), lambda i: (0, 0)),
        compiler_params=pltpu.CompilerParams(dimension_semantics=("arbitrary",)),
    )(act, const_slab)

    fin = out[0:B, 0:C]
    m = out[B:2 * B, 0:H]
    return fin, m


def reference(o1, o2, o3, mask2, params):
    """Pure-JAX reference of the same forward semantics (original param layout)."""
    (wq, bq, wk, bk, wv, bv, wo, bo, cw, cb, wf, bf) = params
    q = o3 @ wq.T + bq
    k = o2 @ wk.T + bk
    v = o1 @ wv.T + bv
    split = lambda x: x.reshape(B, S, NH, HD).transpose(0, 2, 1, 3)
    qh, kh, vh = split(q) / float(HD) ** 0.5, split(k), split(v)
    s = jnp.einsum('bhqd,bhkd->bhqk', qh, kh)
    s = jnp.where(mask2[:, None, None, :] > 0, s, -1e30)
    p = jax.nn.softmax(s, axis=-1)
    a = jnp.einsum('bhqk,bhkd->bhqd', p, vh).transpose(0, 2, 1, 3).reshape(B, S, H)
    a = a @ wo.T + bo
    y = a + o1
    m = y.mean(axis=1)
    ypad = jnp.pad(y, ((0, 0), (1, 1), (0, 0)))
    conv = (ypad[:, 0:S] @ cw[0].T + ypad[:, 1:S + 1] @ cw[1].T
            + ypad[:, 2:S + 2] @ cw[2].T) + cb
    fin = (conv @ wf.T + bf).mean(axis=1)
    return fin, m


if __name__ == "__main__":
    key = jax.random.PRNGKey(0)
    keys = jax.random.split(key, 20)

    # TODO(synk): pretrained HF BERT encoders replaced by deterministic
    # embedding lookups producing the (B, S, H) encoder outputs.
    tables = [0.05 * jax.random.normal(keys[i], (VOCABS[i], H), jnp.float32)
              for i in range(3)]
    ids = [jax.random.randint(keys[3 + i], (B, S), 0, VOCABS[i]) for i in range(3)]
    o1, o2, o3 = [jnp.take(tables[i], ids[i], axis=0) for i in range(3)]

    # attention_mask[1] (1 = real token, 0 = padding); only mask[1] is used
    # downstream (as key_padding_mask after inversion in the torch code).
    mask2 = jnp.array([[1] * S, [1] * (S - 2) + [0] * 2], dtype=jnp.float32)

    def w(i, shape):
        return 0.05 * jax.random.normal(keys[i], shape, jnp.float32)

    params = (
        w(6, (H, H)), w(7, (1, H)),      # Wq, bq
        w(8, (H, H)), w(9, (1, H)),      # Wk, bk
        w(10, (H, H)), w(11, (1, H)),    # Wv, bv
        w(12, (H, H)), w(13, (1, H)),    # out_proj
        w(14, (3, H, H)), w(15, (1, H)), # conv1 weight (tap, out, in), bias
        w(16, (C, H)), w(17, (1, C)),    # final Linear
    )

    # Hoisted, param-only packing (done once).
    const_slab = pack_params(params)
    jax.block_until_ready(const_slab)

    fin, m = bert_forward(o1, o2, o3, mask2, const_slab)
    jax.block_until_ready((fin, m))

    fin_ref, m_ref = reference(o1, o2, o3, mask2, params)
    assert fin.shape == (B, C) and m.shape == (B, H)
    # Slightly relaxed tolerance: softmax denominator uses the EUP approximate
    # reciprocal (pl.reciprocal(..., approx=True)).
    np.testing.assert_allclose(np.asarray(fin), np.asarray(fin_ref),
                               rtol=1e-3, atol=1e-3)
    np.testing.assert_allclose(np.asarray(m), np.asarray(m_ref),
                               rtol=1e-3, atol=1e-3)
    print("KERNEL_OK")
</pallas_src>

<mosaic_0001>
module attributes {stable_mosaic.version = 11 : i64} {
  func.func @bert_head_kernel(%arg0: i32, %arg1: memref<32x128xf32, #tpu.memory_space<vmem>>, %arg2: memref<400x128xf32, #tpu.memory_space<vmem>>, %arg3: memref<4x128xf32, #tpu.memory_space<vmem>>) attributes {dimension_semantics = [#tpu.dimension_semantics<arbitrary>], iteration_bounds = array<i64: 1>, scalar_prefetch = 0 : i64, scratch_operands = 0 : i64, tpu.core_type = #tpu.core_type<tc>, window_params = [{pipeline_mode = #tpu.pipeline_mode<synchronous>, transform_indices = @transform_0, window_bounds = array<i64: 32, 128>}, {pipeline_mode = #tpu.pipeline_mode<synchronous>, transform_indices = @transform_1, window_bounds = array<i64: 400, 128>}, {pipeline_mode = #tpu.pipeline_mode<synchronous>, transform_indices = @transform_2, window_bounds = array<i64: 4, 128>}]} {
    %c0 = arith.constant 0 : index
    %c0_0 = arith.constant 0 : index
    %0 = vector.load %arg1[%c0, %c0_0] : memref<32x128xf32, #tpu.memory_space<vmem>>, vector<16x128xf32>
    %c16 = arith.constant 16 : index
    %c0_1 = arith.constant 0 : index
    %1 = vector.load %arg1[%c16, %c0_1] : memref<32x128xf32, #tpu.memory_space<vmem>>, vector<16x128xf32>
    %2 = vector.extract_strided_slice %1 {offsets = [0, 0], sizes = [16, 64], strides = [1, 1]} : vector<16x128xf32> to vector<16x64xf32>
    %c0_2 = arith.constant 0 : index
    %c0_3 = arith.constant 0 : index
    %3 = vector.load %arg2[%c0_2, %c0_3] : memref<400x128xf32, #tpu.memory_space<vmem>>, vector<128x128xf32>
    %c128 = arith.constant 128 : index
    %c0_4 = arith.constant 0 : index
    %4 = vector.load %arg2[%c128, %c0_4] : memref<400x128xf32, #tpu.memory_space<vmem>>, vector<64x128xf32>
    %5 = vector.extract_strided_slice %4 {offsets = [0, 0], sizes = [64, 64], strides = [1, 1]} : vector<64x128xf32> to vector<64x64xf32>
    %c192 = arith.constant 192 : index
    %c0_5 = arith.constant 0 : index
    %6 = vector.load %arg2[%c192, %c0_5] : memref<400x128xf32, #tpu.memory_space<vmem>>, vector<64x128xf32>
    %7 = vector.extract_strided_slice %6 {offsets = [0, 0], sizes = [64, 64], strides = [1, 1]} : vector<64x128xf32> to vector<64x64xf32>
    %c256 = arith.constant 256 : index
    %c0_6 = arith.constant 0 : index
    %8 = vector.load %arg2[%c256, %c0_6] : memref<400x128xf32, #tpu.memory_space<vmem>>, vector<32x128xf32>
    %9 = vector.extract_strided_slice %8 {offsets = [0, 0], sizes = [32, 32], strides = [1, 1]} : vector<32x128xf32> to vector<32x32xf32>
    %c288 = arith.constant 288 : index
    %c0_7 = arith.constant 0 : index
    %10 = vector.load %arg2[%c288, %c0_7] : memref<400x128xf32, #tpu.memory_space<vmem>>, vector<8x128xf32>
    %c296 = arith.constant 296 : index
    %c0_8 = arith.constant 0 : index
    %11 = vector.load %arg2[%c296, %c0_8] : memref<400x128xf32, #tpu.memory_space<vmem>>, vector<8x128xf32>
    %12 = vector.extract_strided_slice %11 {offsets = [0, 0], sizes = [8, 16], strides = [1, 1]} : vector<8x128xf32> to vector<8x16xf32>
    %c304 = arith.constant 304 : index
    %c0_9 = arith.constant 0 : index
    %13 = vector.load %arg2[%c304, %c0_9] : memref<400x128xf32, #tpu.memory_space<vmem>>, vector<96x128xf32>
    %14 = vector.extract_strided_slice %10 {offsets = [0, 0], sizes = [1, 32], strides = [1, 1]} : vector<8x128xf32> to vector<1x32xf32>
    %15 = vector.extract_strided_slice %10 {offsets = [1, 0], sizes = [1, 128], strides = [1, 1]} : vector<8x128xf32> to vector<1x128xf32>
    %cst = arith.constant dense<0.000000e+00> : vector<16x128xf32>
    %16 = tpu.matmul %0, %3, %cst {dimension_numbers = #tpu.dot_dimension_numbers<[1], [0], [0], [1], [0, 0, 1, 1], [], []>} : vector<16x128xf32>, vector<128x128xf32>, vector<16x128xf32> -> vector<16x128xf32>
    %17 = vector.extract_strided_slice %16 {offsets = [0, 0], sizes = [16, 32], strides = [1, 1]} : vector<16x128xf32> to vector<16x32xf32>
    %18 = vector.extract_strided_slice %16 {offsets = [0, 32], sizes = [16, 64], strides = [1, 1]} : vector<16x128xf32> to vector<16x64xf32>
    %19 = tpu.concatenate %18, %18, %18, %18 in 0 : vector<16x64xf32>, vector<16x64xf32>, vector<16x64xf32>, vector<16x64xf32> -> vector<64x64xf32>
    %20 = arith.mulf %19, %5 : vector<64x64xf32>
    %21 = vector.extract_strided_slice %20 {offsets = [0, 0], sizes = [64, 32], strides = [1, 1]} : vector<64x64xf32> to vector<64x32xf32>
    %22 = vector.extract_strided_slice %20 {offsets = [0, 32], sizes = [64, 32], strides = [1, 1]} : vector<64x64xf32> to vector<64x32xf32>
    "tpu.trace_start"() <{level = 10 : i32, message = "qd,rd->qr"}> : () -> ()
    %cst_10 = arith.constant dense<0.000000e+00> : vector<16x64xf32>
    %23 = tpu.matmul %17, %21, %cst_10 {dimension_numbers = #tpu.dot_dimension_numbers<[1], [1], [0], [0], [0, 0, 1, 0], [], []>} : vector<16x32xf32>, vector<64x32xf32>, vector<16x64xf32> -> vector<16x64xf32>
    "tpu.trace_stop"() : () -> ()
    %24 = arith.addf %23, %2 : vector<16x64xf32>
    %cst_11 = arith.constant dense<0xFF800000> : vector<16xf32>
    %25 = vector.multi_reduction <maximumf>, %24, %cst_11 [1] : vector<16x64xf32> to vector<16xf32>
    %26 = vector.shape_cast %25 : vector<16xf32> to vector<16x1xf32>
    %27 = vector.broadcast %26 : vector<16x1xf32> to vector<16x64xf32>
    %28 = arith.subf %24, %27 : vector<16x64xf32>
    %29 = math.exp %28 : vector<16x64xf32>
    %cst_12 = arith.constant dense<0.000000e+00> : vector<16x64xf32>
    %30 = tpu.matmul %29, %7, %cst_12 {dimension_numbers = #tpu.dot_dimension_numbers<[1], [0], [0], [1], [0, 0, 1, 1], [], []>} : vector<16x64xf32>, vector<64x64xf32>, vector<16x64xf32> -> vector<16x64xf32>
    %31 = tpu.reciprocal %30 {approx = true} : vector<16x64xf32> -> vector<16x64xf32>
    %32 = arith.mulf %29, %31 : vector<16x64xf32>
    %cst_13 = arith.constant dense<0.000000e+00> : vector<16x32xf32>
    %33 = tpu.matmul %32, %22, %cst_13 {dimension_numbers = #tpu.dot_dimension_numbers<[1], [0], [0], [1], [0, 0, 1, 1], [], []>} : vector<16x64xf32>, vector<64x32xf32>, vector<16x32xf32> -> vector<16x32xf32>
    %cst_14 = arith.constant dense<0.000000e+00> : vector<16x32xf32>
    %34 = tpu.matmul %33, %9, %cst_14 {dimension_numbers = #tpu.dot_dimension_numbers<[1], [0], [0], [1], [0, 0, 1, 1], [], []>} : vector<16x32xf32>, vector<32x32xf32>, vector<16x32xf32> -> vector<16x32xf32>
    %35 = vector.broadcast %14 : vector<1x32xf32> to vector<16x32xf32>
    %36 = arith.addf %34, %35 : vector<16x32xf32>
    %37 = vector.extract_strided_slice %0 {offsets = [0, 64], sizes = [16, 32], strides = [1, 1]} : vector<16x128xf32> to vector<16x32xf32>
    %38 = arith.addf %36, %37 : vector<16x32xf32>
    %cst_15 = arith.constant dense<0.000000e+00> : vector<8x32xf32>
    %39 = tpu.matmul %12, %38, %cst_15 {dimension_numbers = #tpu.dot_dimension_numbers<[1], [0], [0], [1], [0, 0, 1, 1], [], []>} : vector<8x16xf32>, vector<16x32xf32>, vector<8x32xf32> -> vector<8x32xf32>
    %40 = vector.extract_strided_slice %39 {offsets = [0, 0], sizes = [2, 32], strides = [1, 1]} : vector<8x32xf32> to vector<2x32xf32>
    %41 = vector.extract_strided_slice %39 {offsets = [4, 0], sizes = [2, 32], strides = [1, 1]} : vector<8x32xf32> to vector<2x32xf32>
    %42 = arith.subf %40, %41 : vector<2x32xf32>
    %43 = vector.extract_strided_slice %39 {offsets = [2, 0], sizes = [2, 32], strides = [1, 1]} : vector<8x32xf32> to vector<2x32xf32>
    %44 = arith.subf %40, %43 : vector<2x32xf32>
    %45 = tpu.concatenate %42, %40, %44 in 1 : vector<2x32xf32>, vector<2x32xf32>, vector<2x32xf32> -> vector<2x96xf32>
    %cst_16 = arith.constant dense<0.000000e+00> : vector<2x128xf32>
    %46 = tpu.matmul %45, %13, %cst_16 {dimension_numbers = #tpu.dot_dimension_numbers<[1], [0], [0], [1], [0, 0, 1, 1], [], []>} : vector<2x96xf32>, vector<96x128xf32>, vector<2x128xf32> -> vector<2x128xf32>
    %47 = vector.broadcast %15 : vector<1x128xf32> to vector<2x128xf32>
    %48 = arith.addf %46, %47 : vector<2x128xf32>
    %cst_17 = arith.constant 0.000000e+00 : f32
    %49 = vector.broadcast %cst_17 : f32 to vector<2x96xf32>
    %50 = tpu.concatenate %40, %49 in 1 : vector<2x32xf32>, vector<2x96xf32> -> vector<2x128xf32>
    %51 = tpu.concatenate %48, %50 in 0 : vector<2x128xf32>, vector<2x128xf32> -> vector<4x128xf32>
    %c0_18 = arith.constant 0 : index
    %c0_19 = arith.constant 0 : index
    %52 = vector.load %arg3[%c0_18, %c0_19] : memref<4x128xf32, #tpu.memory_space<vmem>>, vector<4x128xf32>
    tpu.vector_store %arg3[%c0_18, %c0_19], %51 {strides = array<i32>} : memref<4x128xf32, #tpu.memory_space<vmem>>, vector<4x128xf32>,
    return
  }
  func.func @transform_0(%arg0: i32) -> (i32, i32) {
    %c0_i32 = arith.constant 0 : i32
    %c0_i32_0 = arith.constant 0 : i32
    %c0_i32_1 = arith.constant 0 : i32
    return %c0_i32, %c0_i32_0 : i32, i32
  }
  func.func @transform_1(%arg0: i32) -> (i32, i32) {
    %c0_i32 = arith.constant 0 : i32
    %c0_i32_0 = arith.constant 0 : i32
    %c0_i32_1 = arith.constant 0 : i32
    return %c0_i32, %c0_i32_0 : i32, i32
  }
  func.func @transform_2(%arg0: i32) -> (i32, i32) {
    %c0_i32 = arith.constant 0 : i32
    %c0_i32_0 = arith.constant 0 : i32
    %c0_i32_1 = arith.constant 0 : i32
    return %c0_i32, %c0_i32_0 : i32, i32
  }
}

</mosaic_0001>

<llo_original>
// kernel: tile.9
$region0: #{tile.9}
  %s0 = inlined_call_operand.vmem [shape: f32[16,4,16], index: 0, kind: input, shape index: {}]
  %s1 = inlined_call_operand.vmem [shape: f32[16,64], index: 1, kind: output, shape index: {}]
  $region1: #{tile.9} parent=0
    #allocation0 [shape = 'u8[65536]{0}', space=vmem, size = 0x10000, scoped, tag = 'scoped mem for input reshape']
    %s3 = ssub.s32 16, 1
    %s4 = scalar_lea.vmem %s0, 60
    %v5 = vld [vmem:[%s4] sm:%s3]
    %s6 = scalar_lea.vmem [#allocation0], 120
    %7 = vst [vmem:[%s6] sm:%s3] %v5
    %s8 = scalar_lea.vmem %s0, 56
    %v9 = vld [vmem:[%s8] sm:%s3]
    %s10 = scalar_lea.vmem [#allocation0], 112
    %11 = vst [vmem:[%s10] sm:%s3] %v9
    %s12 = scalar_lea.vmem %s0, 52
    %v13 = vld [vmem:[%s12] sm:%s3]
    %s14 = scalar_lea.vmem [#allocation0], 104
    %15 = vst [vmem:[%s14] sm:%s3] %v13
    %s16 = scalar_lea.vmem %s0, 48
    %v17 = vld [vmem:[%s16] sm:%s3]
    %s18 = scalar_lea.vmem [#allocation0], 96
    %19 = vst [vmem:[%s18] sm:%s3] %v17
    %s20 = scalar_lea.vmem %s0, 44
    %v21 = vld [vmem:[%s20] sm:%s3]
    %s22 = scalar_lea.vmem [#allocation0], 88
    %23 = vst [vmem:[%s22] sm:%s3] %v21
    %s24 = scalar_lea.vmem %s0, 40
    %v25 = vld [vmem:[%s24] sm:%s3]
    %s26 = scalar_lea.vmem [#allocation0], 80
    %27 = vst [vmem:[%s26] sm:%s3] %v25
    %s28 = scalar_lea.vmem %s0, 36
    %v29 = vld [vmem:[%s28] sm:%s3]
    %s30 = scalar_lea.vmem [#allocation0], 72
    %31 = vst [vmem:[%s30] sm:%s3] %v29
    %s32 = scalar_lea.vmem %s0, 32
    %v33 = vld [vmem:[%s32] sm:%s3]
    %s34 = scalar_lea.vmem [#allocation0], 64
    %35 = vst [vmem:[%s34] sm:%s3] %v33
    %s36 = scalar_lea.vmem %s0, 28
    %v37 = vld [vmem:[%s36] sm:%s3]
    %s38 = scalar_lea.vmem [#allocation0], 56
    %39 = vst [vmem:[%s38] sm:%s3] %v37
    %s40 = scalar_lea.vmem %s0, 24
    %v41 = vld [vmem:[%s40] sm:%s3]
    %s42 = scalar_lea.vmem [#allocation0], 48
    %43 = vst [vmem:[%s42] sm:%s3] %v41
    %s44 = scalar_lea.vmem %s0, 20
    %v45 = vld [vmem:[%s44] sm:%s3]
    %s46 = scalar_lea.vmem [#allocation0], 40
    %47 = vst [vmem:[%s46] sm:%s3] %v45
    %s48 = scalar_lea.vmem %s0, 16
    %v49 = vld [vmem:[%s48] sm:%s3]
    %s50 = scalar_lea.vmem [#allocation0], 32
    %51 = vst [vmem:[%s50] sm:%s3] %v49
    %s52 = scalar_lea.vmem %s0, 12
    %v53 = vld [vmem:[%s52] sm:%s3]
    %s54 = scalar_lea.vmem [#allocation0], 24
    %55 = vst [vmem:[%s54] sm:%s3] %v53
    %s56 = scalar_lea.vmem %s0, 8
    %v57 = vld [vmem:[%s56] sm:%s3]
    %s58 = scalar_lea.vmem [#allocation0], 16
    %59 = vst [vmem:[%s58] sm:%s3] %v57
    %s60 = scalar_lea.vmem %s0, 4
    %v61 = vld [vmem:[%s60] sm:%s3]
    %s62 = scalar_lea.vmem [#allocation0], 8
    %63 = vst [vmem:[%s62] sm:%s3] %v61
    %v64 = vld [vmem:[%s0] sm:%s3]
    %65 = vst [vmem:[#allocation0] sm:%s3] %v64
    %v66 = vld [vmem:[#allocation0] ss:$8 sm:$0xf]
    %v67 = vld [vmem:[#allocation0] ss:$8 sm:$0xf0]
    %vm68 = vcmask 1047556
    %v69 = vsel %vm68, %v67, %v66
    %vm70 = vcmask 130048
    %71 = vst.msk [vmem:[%s1] sm:$0xff] %vm70, %v69
    %s72 = scalar_lea.vmem [#allocation0], 64
    %v73 = vld [vmem:[%s72] ss:$8 sm:$0xf]
    %s74 = scalar_lea.vmem [#allocation0], 64
    %v75 = vld [vmem:[%s74] ss:$8 sm:$0xf0]
    %vm76 = vcmask 1047556
    %v77 = vsel %vm76, %v75, %v73
    %vm78 = vcmask 130048
    %s79 = scalar_lea.vmem %s1, 8
    %80 = vst.msk [vmem:[%s79] sm:$0xff] %vm78, %v77
    %s81 = scalar_lea.vmem [#allocation0], 3
    %v82 = vld [vmem:[%s81] ss:$8 sm:$0xf]
    %s83 = scalar_lea.vmem [#allocation0], 3
    %v84 = vld [vmem:[%s83] ss:$8 sm:$0xf0]
    %vm85 = vcmask 1047556
    %v86 = vsel %vm85, %v84, %v82
    %87 = vrot.lane.b32.xlu0 %v86, 48
    %v88 = vpop.permute.xlu0 %87
    %vm89 = vcmask 523648
    %90 = vst.msk [vmem:[%s1] sm:$0xff] %vm89, %v88
    %s91 = scalar_lea.vmem [#allocation0], 67
    %v92 = vld [vmem:[%s91] ss:$8 sm:$0xf]
    %s93 = scalar_lea.vmem [#allocation0], 67
    %v94 = vld [vmem:[%s93] ss:$8 sm:$0xf0]
    %vm95 = vcmask 1047556
    %v96 = vsel %vm95, %v94, %v92
    %97 = vrot.lane.b32.xlu0 %v96, 48
    %v98 = vpop.permute.xlu0 %97
    %vm99 = vcmask 523648
    %s100 = scalar_lea.vmem %s1, 8
    %101 = vst.msk [vmem:[%s100] sm:$0xff] %vm99, %v98
    %s102 = scalar_lea.vmem [#allocation0], 2
    %v103 = vld [vmem:[%s102] ss:$8 sm:$0xf]
    %s104 = scalar_lea.vmem [#allocation0], 2
    %v105 = vld [vmem:[%s104] ss:$8 sm:$0xf0]
    %vm106 = vcmask 1047556
    %v107 = vsel %vm106, %v105, %v103
    %108 = vrot.lane.b32.xlu0 %v107, 32
    %v109 = vpop.permute.xlu0 %108
    %vm110 = vcmask 392448
    %111 = vst.msk [vmem:[%s1] sm:$0xff] %vm110, %v109
    %s112 = scalar_lea.vmem [#allocation0], 66
    %v113 = vld [vmem:[%s112] ss:$8 sm:$0xf]
    %s114 = scalar_lea.vmem [#allocation0], 66
    %v115 = vld [vmem:[%s114] ss:$8 sm:$0xf0]
    %vm116 = vcmask 1047556
    %v117 = vsel %vm116, %v115, %v113
    %118 = vrot.lane.b32.xlu0 %v117, 32
    %v119 = vpop.permute.xlu0 %118
    %vm120 = vcmask 392448
    %s121 = scalar_lea.vmem %s1, 8
    %122 = vst.msk [vmem:[%s121] sm:$0xff] %vm120, %v119
    %s123 = scalar_lea.vmem [#allocation0], 1
    %v124 = vld [vmem:[%s123] ss:$8 sm:$0xf]
    %s125 = scalar_lea.vmem [#allocation0], 1
    %v126 = vld [vmem:[%s125] ss:$8 sm:$0xf0]
    %vm127 = vcmask 1047556
    %v128 = vsel %vm127, %v126, %v124
    %129 = vrot.lane.b32.xlu0 %v128, 16
    %v130 = vpop.permute.xlu0 %129
    %vm131 = vcmask 261248
    %132 = vst.msk [vmem:[%s1] sm:$0xff] %vm131, %v130
    %s133 = scalar_lea.vmem [#allocation0], 65
    %v134 = vld [vmem:[%s133] ss:$8 sm:$0xf]
    %s135 = scalar_lea.vmem [#allocation0], 65
    %v136 = vld [vmem:[%s135] ss:$8 sm:$0xf0]
    %vm137 = vcmask 1047556
    %v138 = vsel %vm137, %v136, %v134
    %139 = vrot.lane.b32.xlu0 %v138, 16
    %v140 = vpop.permute.xlu0 %139
    %vm141 = vcmask 261248
    %s142 = scalar_lea.vmem %s1, 8
    %143 = vst.msk [vmem:[%s142] sm:$0xff] %vm141, %v140

// kernel: bert_forward.1
$region0: #{bert_forward.1}
  #allocation0 [shape = 'u32[]', space=smem, size = 0x4, offset = 0x4, fixed_abs, tag = 'smem constant byte address 0x4 - core index']
  #allocation1 [shape = 'u32[72,128]{1,0:T(1,128)}', space=vmem, size = 0x9000, scoped, tag = 'internal scratch']
  %s0 = inlined_call_operand.vmem [shape: f32[32,128], index: 0, kind: input, shape index: {}]
  %s1 = inlined_call_operand.hbm [shape: f32[400,128], index: 1, kind: input, shape index: {}]
  %s2 = inlined_call_operand.vmem [shape: f32[4,128], index: 2, kind: output, shape index: {}]
  %s3 = sld [smem:[#allocation0]]
  $region22: #{bert_forward.1} parent=0
    _
  %s5 = ssub.s32 1, %s3
  %s6 = scalar_select 0, %s5, %s3
  $region1: #{bert_forward.1} parent=0
    #allocation2 [shape = 'u8[204800]{0}', space=vmem, size = 0x32000, scoped, tag = 'input window, operand 1, single buffered']
    #allocation3 [shape = 's32[1]{0}', space=sflag, size = 0x4, scoped, tag = 'scoped memory for bert_forward.1']
    %7 = vsyncpa [#allocation3], 0
    // Predicated region
    $region2: #{bert_forward.1} parent=1 // pred_check
      _
    $region3: #{bert_forward.1} parent=1 // pred_check_branch
      %9 = sbr.rel (0) target = $region5
    $region4: #{bert_forward.1} parent=1 // pred_region
      _
    $region5: #{bert_forward.1} parent=1 // pred_fallthru
      _
    // Predicated region
    $region6: #{bert_forward.1} parent=1 // pred_check
      _
    $region7: #{bert_forward.1} parent=1 // pred_check_branch
      %11 = sbr.rel (0) target = $region9
    $region8: #{bert_forward.1} parent=1 // pred_region
      %13 = vsyncadd [#allocation3], 0
      %s14 = sshll.u32 %s1, 4
      %s15 = int_to_ptr.hbm [resolvable:$true] %s14
      %s16 = sshll.u32 [#allocation2], 4
      %s17 = int_to_ptr.vmem [resolvable:$true] %s16
      %22 = dma.hbm_to_vmem [thread:$0]  %s15, 6400, %s17, [#allocation3], 128, 128, 8
    $region9: #{bert_forward.1} parent=1 // pred_fallthru
      _
    // Predicated region
    $region10: #{bert_forward.1} parent=1 // pred_check
      _
    $region11: #{bert_forward.1} parent=1 // pred_check_branch
      %24 = sbr.rel (0) target = $region13
    $region12: #{bert_forward.1} parent=1 // pred_region
      %26 = dma.done [#allocation3], 6400
    $region13: #{bert_forward.1} parent=1 // pred_fallthru
      _
    %v27 = vld [vmem:[%s0] sm:$0xff]
    %v28 = vld [vmem:[%s0 + $0x8] sm:$0xff]
    %v29 = vld [vmem:[%s0 + $0x10] sm:$0xff]
    %v30 = vld [vmem:[%s0 + $0x18] sm:$0xff]
    %v31 = vld [vmem:[#allocation2] sm:$0xff]
    %v32 = vld [vmem:[#allocation2 + $0x8] sm:$0xff]
    %v33 = vld [vmem:[#allocation2 + $0x10] sm:$0xff]
    %v34 = vld [vmem:[#allocation2 + $0x18] sm:$0xff]
    %v35 = vld [vmem:[#allocation2 + $0x20] sm:$0xff]
    %v36 = vld [vmem:[#allocation2 + $0x28] sm:$0xff]
    %v37 = vld [vmem:[#allocation2 + $0x30] sm:$0xff]
    %v38 = vld [vmem:[#allocation2 + $0x38] sm:$0xff]
    %v39 = vld [vmem:[#allocation2 + $0x40] sm:$0xff]
    %v40 = vld [vmem:[#allocation2 + $0x48] sm:$0xff]
    %v41 = vld [vmem:[#allocation2 + $0x50] sm:$0xff]
    %v42 = vld [vmem:[#allocation2 + $0x58] sm:$0xff]
    %v43 = vld [vmem:[#allocation2 + $0x60] sm:$0xff]
    %v44 = vld [vmem:[#allocation2 + $0x68] sm:$0xff]
    %v45 = vld [vmem:[#allocation2 + $0x70] sm:$0xff]
    %v46 = vld [vmem:[#allocation2 + $0x78] sm:$0xff]
    %v47 = vld [vmem:[#allocation2 + $0x80] sm:$0xff]
    %v48 = vld [vmem:[#allocation2 + $0x88] sm:$0xff]
    %v49 = vld [vmem:[#allocation2 + $0x90] sm:$0xff]
    %v50 = vld [vmem:[#allocation2 + $0x98] sm:$0xff]
    %v51 = vld [vmem:[#allocation2 + $0xa0] sm:$0xff]
    %v52 = vld [vmem:[#allocation2 + $0xa8] sm:$0xff]
    %v53 = vld [vmem:[#allocation2 + $0xb0] sm:$0xff]
    %v54 = vld [vmem:[#allocation2 + $0xb8] sm:$0xff]
    %v55 = vld [vmem:[#allocation2 + $0xc0] sm:$0xff]
    %v56 = vld [vmem:[#allocation2 + $0xc8] sm:$0xff]
    %v57 = vld [vmem:[#allocation2 + $0xd0] sm:$0xff]
    %v58 = vld [vmem:[#allocation2 + $0xd8] sm:$0xff]
    %v59 = vld [vmem:[#allocation2 + $0xe0] sm:$0xff]
    %v60 = vld [vmem:[#allocation2 + $0xe8] sm:$0xff]
    %v61 = vld [vmem:[#allocation2 + $0xf0] sm:$0xff]
    %v62 = vld [vmem:[#allocation2 + $0xf8] sm:$0xff]
    %v63 = vld [vmem:[#allocation2 + $0x100] sm:$0xff]
    %v64 = vld [vmem:[#allocation2 + $0x108] sm:$0xff]
    %v65 = vld [vmem:[#allocation2 + $0x110] sm:$0xff]
    %v66 = vld [vmem:[#allocation2 + $0x118] sm:$0xff]
    %v67 = vld [vmem:[#allocation2 + $0x120] sm:$0xff]
    %v68 = vld [vmem:[#allocation2 + $0x128] sm:$0xff]
    %v69 = vld [vmem:[#allocation2 + $0x130] sm:$0xff]
    %v70 = vld [vmem:[#allocation2 + $0x138] sm:$0xff]
    %v71 = vld [vmem:[#allocation2 + $0x140] sm:$0xff]
    %v72 = vld [vmem:[#allocation2 + $0x148] sm:$0xff]
    %v73 = vld [vmem:[#allocation2 + $0x150] sm:$0xff]
    %v74 = vld [vmem:[#allocation2 + $0x158] sm:$0xff]
    %v75 = vld [vmem:[#allocation2 + $0x160] sm:$0xff]
    %v76 = vld [vmem:[#allocation2 + $0x168] sm:$0xff]
    %v77 = vld [vmem:[#allocation2 + $0x170] sm:$0xff]
    %v78 = vld [vmem:[#allocation2 + $0x178] sm:$0xff]
    %v79 = vld [vmem:[#allocation2 + $0x180] sm:$0xff]
    %v80 = vld [vmem:[#allocation2 + $0x188] sm:$0xff]
    %81 = vmatpush.msra.mxu0 %v46
    %82 = vmatpush.msra.mxu0 %v45
    %83 = vmatpush.msra.mxu0 %v44
    %84 = vmatpush.msra.mxu0 %v43
    %85 = vmatpush.msra.mxu0 %v42
    %86 = vmatpush.msra.mxu0 %v41
    %87 = vmatpush.msra.mxu0 %v40
    %88 = vmatpush.msra.mxu0 %v39
    %89 = vmatpush.msra.mxu0 %v38
    %90 = vmatpush.msra.mxu0 %v37
    %91 = vmatpush.msra.mxu0 %v36
    %92 = vmatpush.msra.mxu0 %v35
    %93 = vmatpush.msra.mxu0 %v34
    %94 = vmatpush.msra.mxu0 %v33
    %95 = vmatpush.msra.mxu0 %v32
    %96 = vmatpush.msra.mxu0 %v31
    %97 = vmatmul.f32.gmra.mxu0 %v27
    %v98 = vpop.f32.mrf.mxu0
    %v99 = vadd.f32 0.0, %v98
    %100 = vmatmul.f32.gmra.mxu0 %v28
    %v101 = vpop.f32.mrf.mxu0
    %v102 = vadd.f32 0.0, %v101
    %103 = vdwg.mxu0
    %112 = vrot.lane.b32.xlu0 %v47, 32
    %v113 = vpop.permute.xlu0 %112
    %114 = vrot.lane.b32.xlu0 %v48, 32
    %v115 = vpop.permute.xlu0 %114
    %116 = vrot.lane.b32.xlu0 %v49, 32
    %v117 = vpop.permute.xlu0 %116
    %118 = vrot.lane.b32.xlu0 %v50, 32
    %v119 = vpop.permute.xlu0 %118
    %120 = vrot.lane.b32.xlu0 %v51, 32
    %v121 = vpop.permute.xlu0 %120
    %122 = vrot.lane.b32.xlu0 %v52, 32
    %v123 = vpop.permute.xlu0 %122
    %124 = vrot.lane.b32.xlu0 %v53, 32
    %v125 = vpop.permute.xlu0 %124
    %126 = vrot.lane.b32.xlu0 %v54, 32
    %v127 = vpop.permute.xlu0 %126
    %v136 = vmul.f32 %v99, %v113
    %v137 = vmul.f32 %v102, %v115
    %v138 = vmul.f32 %v99, %v117
    %v139 = vmul.f32 %v102, %v119
    %v140 = vmul.f32 %v99, %v121
    %v141 = vmul.f32 %v102, %v123
    %v142 = vmul.f32 %v99, %v125
    %v143 = vmul.f32 %v102, %v127
    %152 = vrot.lane.b32.xlu0 %v136, 96
    %v153 = vpop.permute.xlu0 %152
    %154 = vrot.lane.b32.xlu0 %v137, 96
    %v155 = vpop.permute.xlu0 %154
    %156 = vrot.lane.b32.xlu0 %v138, 96
    %v157 = vpop.permute.xlu0 %156
    %158 = vrot.lane.b32.xlu0 %v139, 96
    %v159 = vpop.permute.xlu0 %158
    %160 = vrot.lane.b32.xlu0 %v140, 96
    %v161 = vpop.permute.xlu0 %160
    %162 = vrot.lane.b32.xlu0 %v141, 96
    %v163 = vpop.permute.xlu0 %162
    %164 = vrot.lane.b32.xlu0 %v142, 96
    %v165 = vpop.permute.xlu0 %164
    %166 = vrot.lane.b32.xlu0 %v143, 96
    %v167 = vpop.permute.xlu0 %166
    %vm168 = vcmask 261120
    %v170 = vsel %vm168, %v99, 0
    %v173 = vsel %vm168, %v102, 0
    %v175 = vsel %vm168, %v153, 0
    %v177 = vsel %vm168, %v155, 0
    %v179 = vsel %vm168, %v157, 0
    %v181 = vsel %vm168, %v159, 0
    %v183 = vsel %vm168, %v161, 0
    %v185 = vsel %vm168, %v163, 0
    %v187 = vsel %vm168, %v165, 0
    %v189 = vsel %vm168, %v167, 0
    %191 = vmatpush.xpose.msra.mxu0 0.0
    %192 = vmatpush.xpose.msra.mxu0 0.0
    %193 = vmatpush.xpose.msra.mxu0 0.0
    %194 = vmatpush.xpose.msra.mxu0 0.0
    %195 = vmatpush.xpose.msra.mxu0 0.0
    %196 = vmatpush.xpose.msra.mxu0 0.0
    %197 = vmatpush.xpose.msra.mxu0 0.0
    %198 = vmatpush.xpose.msra.mxu0 0.0
    %199 = vmatpush.xpose.msra.mxu0 %v189
    %200 = vmatpush.xpose.msra.mxu0 %v187
    %201 = vmatpush.xpose.msra.mxu0 %v185
    %202 = vmatpush.xpose.msra.mxu0 %v183
    %203 = vmatpush.xpose.msra.mxu0 %v181
    %204 = vmatpush.xpose.msra.mxu0 %v179
    %205 = vmatpush.xpose.msra.mxu0 %v177
    %206 = vmatpush.xpose.msra.mxu0 %v175
    %207 = vmatmul.f32.gmra.mxu0 %v170
    %v208 = vpop.f32.mrf.mxu0
    %v209 = vadd.f32 %v29, %v208
    %210 = vmatmul.f32.gmra.mxu0 %v173
    %v211 = vpop.f32.mrf.mxu0
    %v212 = vadd.f32 %v30, %v211
    %213 = vdwg.mxu0
    %vm214 = vcmask 523264
    %v215 = vsel %vm214, %v209, -inf
    %216 = vmax.xlane.f32.xlu0 %v215
    %v217 = vpop.xlane.xlu0 %216
    %v218 = vsel %vm214, %v212, -inf
    %219 = vmax.xlane.f32.xlu0 %v218
    %v220 = vpop.xlane.xlu0 %219
    %v221 = vsub.f32 %v209, %v217
    %v222 = vsub.f32 %v212, %v220
    %v223 = vmul.f32 %v221, 1.442695
    %v224 = vpow.pop %v223
    %v225 = vmul.f32 %v222, 1.442695
    %v226 = vpow.pop %v225
    %v228 = vsel %vm214, %v224, 0
    %v231 = vsel %vm214, %v226, 0
    %233 = vmatpush.msra.mxu0 0.0
    %234 = vmatpush.msra.mxu0 0.0
    %235 = vmatpush.msra.mxu0 0.0
    %236 = vmatpush.msra.mxu0 0.0
    %237 = vmatpush.msra.mxu0 0.0
    %238 = vmatpush.msra.mxu0 0.0
    %239 = vmatpush.msra.mxu0 0.0
    %240 = vmatpush.msra.mxu0 0.0
    %241 = vmatpush.msra.mxu0 %v62
    %242 = vmatpush.msra.mxu0 %v61
    %243 = vmatpush.msra.mxu0 %v60
    %244 = vmatpush.msra.mxu0 %v59
    %245 = vmatpush.msra.mxu0 %v58
    %246 = vmatpush.msra.mxu0 %v57
    %247 = vmatpush.msra.mxu0 %v56
    %248 = vmatpush.msra.mxu0 %v55
    %249 = vmatmul.f32.gmra.mxu0 %v228
    %v250 = vpop.f32.mrf.mxu0
    %v251 = vadd.f32 0.0, %v250
    %252 = vmatmul.f32.gmra.mxu0 %v231
    %v253 = vpop.f32.mrf.mxu0
    %v254 = vadd.f32 0.0, %v253
    %255 = vdwg.mxu0
    %v256 = vrcp.pop %v251
    %v257 = vrcp.pop %v254
    %v258 = vmul.f32 %v224, %v256
    %v259 = vmul.f32 %v226, %v257
    %260 = vrot.lane.b32.xlu0 %v136, 64
    %v261 = vpop.permute.xlu0 %260
    %262 = vrot.lane.b32.xlu0 %v137, 64
    %v263 = vpop.permute.xlu0 %262
    %264 = vrot.lane.b32.xlu0 %v138, 64
    %v265 = vpop.permute.xlu0 %264
    %266 = vrot.lane.b32.xlu0 %v139, 64
    %v267 = vpop.permute.xlu0 %266
    %268 = vrot.lane.b32.xlu0 %v140, 64
    %v269 = vpop.permute.xlu0 %268
    %270 = vrot.lane.b32.xlu0 %v141, 64
    %v271 = vpop.permute.xlu0 %270
    %272 = vrot.lane.b32.xlu0 %v142, 64
    %v273 = vpop.permute.xlu0 %272
    %274 = vrot.lane.b32.xlu0 %v143, 64
    %v275 = vpop.permute.xlu0 %274
    %v285 = vsel %vm214, %v258, 0
    %v288 = vsel %vm214, %v259, 0
    %290 = vmatpush.msra.mxu0 0.0
    %291 = vmatpush.msra.mxu0 0.0
    %292 = vmatpush.msra.mxu0 0.0
    %293 = vmatpush.msra.mxu0 0.0
    %294 = vmatpush.msra.mxu0 0.0
    %295 = vmatpush.msra.mxu0 0.0
    %296 = vmatpush.msra.mxu0 0.0
    %297 = vmatpush.msra.mxu0 0.0
    %298 = vmatpush.msra.mxu0 %v275
    %299 = vmatpush.msra.mxu0 %v273
    %300 = vmatpush.msra.mxu0 %v271
    %301 = vmatpush.msra.mxu0 %v269
    %302 = vmatpush.msra.mxu0 %v267
    %303 = vmatpush.msra.mxu0 %v265
    %304 = vmatpush.msra.mxu0 %v263
    %305 = vmatpush.msra.mxu0 %v261
    %306 = vmatmul.f32.gmra.mxu0 %v285
    %v307 = vpop.f32.mrf.mxu0
    %v308 = vadd.f32 0.0, %v307
    %309 = vmatmul.f32.gmra.mxu0 %v288
    %v310 = vpop.f32.mrf.mxu0
    %v311 = vadd.f32 0.0, %v310
    %312 = vdwg.mxu0
    %v313 = vperm.slane %v67, 0
    %v315 = vsel %vm168, %v308, 0
    %v318 = vsel %vm168, %v311, 0
    %320 = vmatpush.msra.mxu0 0.0
    %321 = vmatpush.msra.mxu0 0.0
    %322 = vmatpush.msra.mxu0 0.0
    %323 = vmatpush.msra.mxu0 0.0
    %324 = vmatpush.msra.mxu0 0.0
    %325 = vmatpush.msra.mxu0 0.0
    %326 = vmatpush.msra.mxu0 0.0
    %327 = vmatpush.msra.mxu0 0.0
    %328 = vmatpush.msra.mxu0 0.0
    %329 = vmatpush.msra.mxu0 0.0
    %330 = vmatpush.msra.mxu0 0.0
    %331 = vmatpush.msra.mxu0 0.0
    %332 = vmatpush.msra.mxu0 %v66
    %333 = vmatpush.msra.mxu0 %v65
    %334 = vmatpush.msra.mxu0 %v64
    %335 = vmatpush.msra.mxu0 %v63
    %336 = vmatmul.f32.gmra.mxu0 %v315
    %v337 = vpop.f32.mrf.mxu0
    %v338 = vadd.f32 %v313, %v337
    %339 = vmatmul.f32.gmra.mxu0 %v318
    %v340 = vpop.f32.mrf.mxu0
    %v341 = vadd.f32 %v313, %v340
    %342 = vdwg.mxu0
    %345 = vrot.lane.b32.xlu0 %v27, 64
    %v346 = vpop.permute.xlu0 %345
    %347 = vrot.lane.b32.xlu0 %v28, 64
    %v348 = vpop.permute.xlu0 %347
    %v351 = vadd.f32 %v338, %v346
    %v352 = vadd.f32 %v341, %v348
    %vm353 = vcmask 130048
    %v355 = vsel %vm353, %v68, 0
    %357 = vmatpush.msra.mxu0 0.0
    %358 = vmatpush.msra.mxu0 0.0
    %359 = vmatpush.msra.mxu0 0.0
    %360 = vmatpush.msra.mxu0 0.0
    %361 = vmatpush.msra.mxu0 0.0
    %362 = vmatpush.msra.mxu0 0.0
    %363 = vmatpush.msra.mxu0 0.0
    %364 = vmatpush.msra.mxu0 0.0
    %365 = vmatpush.msra.mxu0 0.0
    %366 = vmatpush.msra.mxu0 0.0
    %367 = vmatpush.msra.mxu0 0.0
    %368 = vmatpush.msra.mxu0 0.0
    %369 = vmatpush.msra.mxu0 0.0
    %370 = vmatpush.msra.mxu0 0.0
    %371 = vmatpush.msra.mxu0 %v352
    %372 = vmatpush.msra.mxu0 %v351
    %373 = vmatmul.f32.gmra.mxu0 %v355
    %v374 = vpop.f32.mrf.mxu0
    %v375 = vadd.f32 0.0, %v374
    %376 = vdwg.mxu0
    %v378 = vrot.slane %v375, 4
    %v380 = vsub.f32 %v375, %v378
    %v381 = vrot.slane %v375, 2
    %v383 = vsub.f32 %v375, %v381
    %384 = vrot.lane.b32.xlu0 %v375, 32
    %v385 = vpop.permute.xlu0 %384
    %388 = vrot.lane.b32.xlu0 %v383, 64
    %v389 = vpop.permute.xlu0 %388
    %v391 = vsel %vm168, %v380, %v385
    %v392 = vsel %vm214, %v391, %v389
    %v393 = vperm.slane %v67, 1
    %vm394 = vcmask 785408
    %v396 = vsel %vm394, %v392, 0
    %398 = vmatpush.msra.mxu0 0.0
    %399 = vmatpush.msra.mxu0 0.0
    %400 = vmatpush.msra.mxu0 0.0
    %401 = vmatpush.msra.mxu0 0.0
    %402 = vmatpush.msra.mxu0 %v80
    %403 = vmatpush.msra.mxu0 %v79
    %404 = vmatpush.msra.mxu0 %v78
    %405 = vmatpush.msra.mxu0 %v77
    %406 = vmatpush.msra.mxu0 %v76
    %407 = vmatpush.msra.mxu0 %v75
    %408 = vmatpush.msra.mxu0 %v74
    %409 = vmatpush.msra.mxu0 %v73
    %410 = vmatpush.msra.mxu0 %v72
    %411 = vmatpush.msra.mxu0 %v71
    %412 = vmatpush.msra.mxu0 %v70
    %413 = vmatpush.msra.mxu0 %v69
    %414 = vmatmul.f32.gmra.mxu0 %v396
    %v415 = vpop.f32.mrf.mxu0
    %v416 = vadd.f32 %v393, %v415
    %417 = vdwg.mxu0
    %v418 = vsel %vm168, %v375, 0.0
    %v420 = vrot.slane %v418, 6
    %vm422 = vcmask 1041408
    %v423 = vsel %vm422, %v416, %v420
    %424 = vst [vmem:[%s2] sm:$0xf] %v423
    // Predicated region
    $region14: #{bert_forward.1} parent=1 // pred_check
      _
    $region15: #{bert_forward.1} parent=1 // pred_check_branch
      %426 = sbr.rel (0) target = $region17
    $region16: #{bert_forward.1} parent=1 // pred_region
      _
    $region17: #{bert_forward.1} parent=1 // pred_fallthru
      _
    // Predicated region
    $region18: #{bert_forward.1} parent=1 // pred_check
      _
    $region19: #{bert_forward.1} parent=1 // pred_check_branch
      %428 = sbr.rel (0) target = $region21
    $region20: #{bert_forward.1} parent=1 // pred_region
      _
    $region21: #{bert_forward.1} parent=1 // pred_fallthru
      _
    %429 = vsyncpa [#allocation3], 1

</llo_original>
